<compile_context>
chip_gen: v6e
topology: v6e:2x2x1
jax: 0.10.0
libtpu: 0.0.40
codegen_flags: <defaults>
</compile_context>

<pallas_src>
from typing import Optional, Tuple

import jax
import jax.numpy as jnp
from jax.experimental import pallas as pl
from jax.experimental.pallas import tpu as pltpu


# ---------------------------------------------------------------------------
# Kernels
# ---------------------------------------------------------------------------
def _linear_bias_kernel(x_ref, w_ref, b_ref, o_ref, acc_ref):
    """One (M-tile, N-tile) output block; K reduction on grid axis 2.

    x_ref:  [tm, tk]   activation tile
    w_ref:  [tk, tn]   pre-transposed weight tile ([K, N] layout)
    b_ref:  [1,  tn]   bias tile, float32
    o_ref:  [tm, tn]   output tile
    acc_ref:[tm, tn]   f32 accumulator scratch (persists across k)
    """
    k = pl.program_id(2)

    @pl.when(k == 0)
    def _():
        acc_ref[...] = jnp.zeros_like(acc_ref)

    # Plain [tm,tk] @ [tk,tn] -> MXU, no per-tile transpose needed.
    acc_ref[...] += jnp.dot(x_ref[...], w_ref[...],
                            preferred_element_type=jnp.float32)

    @pl.when(k == pl.num_programs(2) - 1)
    def _():
        # Bias added in f32, single cast + store in the epilogue only.
        o_ref[...] = (acc_ref[...] + b_ref[...]).astype(o_ref.dtype)


def _linear_nobias_kernel(x_ref, w_ref, o_ref, acc_ref):
    k = pl.program_id(2)

    @pl.when(k == 0)
    def _():
        acc_ref[...] = jnp.zeros_like(acc_ref)

    acc_ref[...] += jnp.dot(x_ref[...], w_ref[...],
                            preferred_element_type=jnp.float32)

    @pl.when(k == pl.num_programs(2) - 1)
    def _():
        o_ref[...] = acc_ref[...].astype(o_ref.dtype)


# ---------------------------------------------------------------------------
# Wrapper
# ---------------------------------------------------------------------------
def _round_up(x: int, m: int) -> int:
    return ((x + m - 1) // m) * m


def pallas_linear(x: jax.Array,
                  weight_t: jax.Array,
                  bias: Optional[jax.Array],
                  *,
                  add_bias: bool,
                  tm: Optional[int] = None,
                  tn: Optional[int] = None,
                  tk: Optional[int] = None) -> jax.Array:
    """y = x @ weight_t (+ bias), weight_t is the pre-transposed [K, N] weight."""
    *lead, K = x.shape
    K_w, N = weight_t.shape
    assert K == K_w, (K, K_w)
    out_dtype = x.dtype

    x2d = x.reshape(-1, K)
    M = x2d.shape[0]

    # Cast activations to the parameter compute dtype (e.g. bf16) if needed;
    # the accumulator stays f32 in the kernel.
    compute_dtype = weight_t.dtype
    if x2d.dtype != compute_dtype:
        x2d = x2d.astype(compute_dtype)

    # ---- Tile selection: as large as the problem allows (big-M prefill gets
    # full 256/512-wide tiles; decode-style small M falls back gracefully).
    tm = tm if tm is not None else min(256, _round_up(M, 8))
    tn = tn if tn is not None else min(512, _round_up(N, 128))
    tk = tk if tk is not None else min(512, _round_up(K, 128))

    Mp = _round_up(M, tm)
    Np = _round_up(N, tn)
    Kp = _round_up(K, tk)

    # v7x megacore: make sure at least one parallel axis has extent >= 2 when
    # the shape allows it (harmless on single-TC v5e/v6e).
    if Mp // tm == 1 and Np // tn == 1 and tn % 256 == 0:
        tn = tn // 2

    # ---- Zero-pad to tile multiples (padding is inert for a matmul).
    if (Mp, Kp) != (M, K):
        x2d = jnp.pad(x2d, ((0, Mp - M), (0, Kp - K)))
    if (Kp, Np) != (K, N):
        weight_t = jnp.pad(weight_t, ((0, Kp - K), (0, Np - N)))

    grid = (Mp // tm, Np // tn, Kp // tk)

    # ---- VMEM budget: double-buffered inputs/outputs + f32 accumulator.
    in_bytes = jnp.dtype(compute_dtype).itemsize
    out_bytes = jnp.dtype(out_dtype).itemsize
    vmem_est = (2 * (tm * tk * in_bytes + tk * tn * in_bytes + tm * tn * out_bytes)
                + tm * tn * 4)
    if add_bias:
        vmem_est += 2 * tn * 4
    vmem_limit = int(min(max(2 * vmem_est + (8 << 20), 32 << 20), 48 << 20))

    x_spec = pl.BlockSpec((tm, tk), lambda i, j, k: (i, k))
    w_spec = pl.BlockSpec((tk, tn), lambda i, j, k: (k, j))
    o_spec = pl.BlockSpec((tm, tn), lambda i, j, k: (i, j))

    if add_bias:
        assert bias is not None
        bias_arr = bias.astype(jnp.float32).reshape(1, N)
        if Np != N:
            bias_arr = jnp.pad(bias_arr, ((0, 0), (0, Np - N)))
        kernel = _linear_bias_kernel
        in_specs = [x_spec, w_spec, pl.BlockSpec((1, tn), lambda i, j, k: (0, j))]
        operands = (x2d, weight_t, bias_arr)
    else:
        kernel = _linear_nobias_kernel
        in_specs = [x_spec, w_spec]
        operands = (x2d, weight_t)

    out = pl.pallas_call(
        kernel,
        out_shape=jax.ShapeDtypeStruct((Mp, Np), out_dtype),
        grid_spec=pltpu.PrefetchScalarGridSpec(
            num_scalar_prefetch=0,
            grid=grid,
            in_specs=in_specs,
            out_specs=o_spec,
            scratch_shapes=[pltpu.VMEM((tm, tn), jnp.float32)],
        ),
        compiler_params=pltpu.CompilerParams(
            dimension_semantics=("parallel", "parallel", "arbitrary"),
            vmem_limit_bytes=vmem_limit),
    )(*operands)

    if (Mp, Np) != (M, N):
        out = out[:M, :N]
    return out.reshape(*lead, N)


# ---------------------------------------------------------------------------
# Module
# ---------------------------------------------------------------------------
class LinearBase:
    """JAX/Pallas port of vLLM's LinearBase + UnquantizedLinearMethod."""

    def __init__(self,
                 input_size: int,
                 output_size: int,
                 bias: bool = True,
                 skip_bias_add: bool = False,
                 params_dtype=jnp.float32,
                 seed: int = 0):
        self.input_size = input_size
        self.output_size = output_size
        self.skip_bias_add = skip_bias_add
        self.params_dtype = params_dtype

        # Deterministic synthetic parameters (torch.empty analog -> random init).
        kw, kb = jax.random.split(jax.random.PRNGKey(seed))
        w_f32 = (jax.random.normal(kw, (output_size, input_size), dtype=jnp.float32)
                 / jnp.sqrt(input_size))
        # PyTorch layout [output_size, input_size] (output_dim=0, input_dim=1).
        self.weight = w_f32.astype(params_dtype)
        # Pre-transposed copy [K, N]: one-time cost; the kernel's inner loop
        # then feeds the MXU without per-tile XLU transposes.
        self.weight_t = jnp.asarray(self.weight.T)
        self.bias = (jax.random.normal(kb, (output_size,), dtype=jnp.float32)
                     * 0.01).astype(params_dtype) if bias else None

    def __call__(self, x) -> Tuple[jax.Array, Optional[jax.Array]]:
        add_bias = (self.bias is not None) and (not self.skip_bias_add)
        y = pallas_linear(x, self.weight_t,
                          self.bias if add_bias else None,
                          add_bias=add_bias)
        output_bias = self.bias if self.skip_bias_add else None
        return y, output_bias


# TODO(synk): quantized linear methods (quant_config.get_quant_method) and TP
# weight-sharding metadata (set_weight_attrs) have no Pallas equivalent here;
# only the UnquantizedLinearMethod path is implemented.

if __name__ == "__main__":
    batch, seq, input_size, output_size = 2, 8, 256, 128

    key = jax.random.PRNGKey(0)
    x = jax.random.normal(key, (batch, seq, input_size), dtype=jnp.float32)

    # --- f32 path, bias added in-kernel ------------------------------------
    layer = LinearBase(input_size, output_size, bias=True,
                       skip_bias_add=False, params_dtype=jnp.float32, seed=0)
    y, out_bias = layer(x)
    y = jax.block_until_ready(y)
    y_ref = jnp.einsum("bsk,nk->bsn", x, layer.weight) + layer.bias
    assert y.shape == (batch, seq, output_size)
    assert out_bias is None
    assert jnp.allclose(y, y_ref, atol=2e-4, rtol=2e-4), float(
        jnp.max(jnp.abs(y - y_ref)))

    # --- skip_bias_add + non-divisible shapes (exercises padding path) -----
    in2, out2 = 200, 96                      # K, N not multiples of 128
    x2 = jax.random.normal(jax.random.PRNGKey(1), (2, 7, in2), dtype=jnp.float32)
    layer2 = LinearBase(in2, out2, bias=True,
                        skip_bias_add=True, params_dtype=jnp.float32, seed=1)
    y2, out_bias2 = layer2(x2)
    jax.block_until_ready(y2)
    y2_ref = jnp.einsum("bsk,nk->bsn", x2, layer2.weight)
    assert y2.shape == (2, 7, out2)
    assert out_bias2 is not None and out_bias2.shape == (out2,)
    assert jnp.allclose(y2, y2_ref, atol=2e-4, rtol=2e-4), float(
        jnp.max(jnp.abs(y2 - y2_ref)))

    # --- bf16 params/activations (bf16 MXU inputs, f32 accumulate) ---------
    layer3 = LinearBase(input_size, output_size, bias=True,
                        skip_bias_add=False, params_dtype=jnp.bfloat16, seed=2)
    x3 = x.astype(jnp.bfloat16)
    y3, _ = layer3(x3)
    jax.block_until_ready(y3)
    y3_ref = (jnp.einsum("bsk,nk->bsn",
                         x3.astype(jnp.float32),
                         layer3.weight.astype(jnp.float32))
              + layer3.bias.astype(jnp.float32))
    assert y3.dtype == jnp.bfloat16
    assert jnp.allclose(y3.astype(jnp.float32), y3_ref, atol=8e-2, rtol=8e-2), \
        float(jnp.max(jnp.abs(y3.astype(jnp.float32) - y3_ref)))

    print("KERNEL_OK")
</pallas_src>

<mosaic_0001>
module attributes {stable_mosaic.version = 11 : i64} {
  func.func @_linear_bias_kernel(%arg0: i32, %arg1: i32, %arg2: i32, %arg3: memref<16x256xf32, #tpu.memory_space<vmem>>, %arg4: memref<256x128xf32, #tpu.memory_space<vmem>>, %arg5: memref<1x128xf32, #tpu.memory_space<vmem>>, %arg6: memref<16x128xf32, #tpu.memory_space<vmem>>, %arg7: memref<16x128xf32, #tpu.memory_space<vmem>>) attributes {dimension_semantics = [#tpu.dimension_semantics<parallel>, #tpu.dimension_semantics<parallel>, #tpu.dimension_semantics<arbitrary>], iteration_bounds = array<i64: 1, 1, 1>, scalar_prefetch = 0 : i64, scratch_operands = 1 : i64, tpu.core_type = #tpu.core_type<tc>, window_params = [{transform_indices = @transform_0, window_bounds = array<i64: 16, 256>}, {transform_indices = @transform_1, window_bounds = array<i64: 256, 128>}, {transform_indices = @transform_2, window_bounds = array<i64: 1, 128>}, {transform_indices = @transform_3, window_bounds = array<i64: 16, 128>}]} {
    %c0_i32 = arith.constant 0 : i32
    %0 = arith.cmpi eq, %arg2, %c0_i32 : i32
    %1 = arith.extui %0 : i1 to i32
    %c0_i32_0 = arith.constant 0 : i32
    %2 = arith.cmpi ne, %1, %c0_i32_0 : i32
    scf.if %2 {
      %cst_10 = arith.constant 0.000000e+00 : f32
      %12 = vector.broadcast %cst_10 : f32 to vector<16x128xf32>
      %c0_11 = arith.constant 0 : index
      %c0_12 = arith.constant 0 : index
      %13 = vector.load %arg7[%c0_11, %c0_12] : memref<16x128xf32, #tpu.memory_space<vmem>>, vector<16x128xf32>
      tpu.vector_store %arg7[%c0_11, %c0_12], %12 {strides = array<i32>} : memref<16x128xf32, #tpu.memory_space<vmem>>, vector<16x128xf32>,
    } else {
    }
    %c0 = arith.constant 0 : index
    %c0_1 = arith.constant 0 : index
    %3 = vector.load %arg7[%c0, %c0_1] : memref<16x128xf32, #tpu.memory_space<vmem>>, vector<16x128xf32>
    %c0_2 = arith.constant 0 : index
    %c0_3 = arith.constant 0 : index
    %4 = vector.load %arg3[%c0_2, %c0_3] : memref<16x256xf32, #tpu.memory_space<vmem>>, vector<16x256xf32>
    %c0_4 = arith.constant 0 : index
    %c0_5 = arith.constant 0 : index
    %5 = vector.load %arg4[%c0_4, %c0_5] : memref<256x128xf32, #tpu.memory_space<vmem>>, vector<256x128xf32>
    %cst = arith.constant dense<0.000000e+00> : vector<16x128xf32>
    %6 = tpu.matmul %4, %5, %cst {dimension_numbers = #tpu.dot_dimension_numbers<[1], [0], [0], [1], [0, 0, 1, 1], [], []>} : vector<16x256xf32>, vector<256x128xf32>, vector<16x128xf32> -> vector<16x128xf32>
    %7 = arith.addf %3, %6 : vector<16x128xf32>
    %c0_6 = arith.constant 0 : index
    %c0_7 = arith.constant 0 : index
    %8 = vector.load %arg7[%c0_6, %c0_7] : memref<16x128xf32, #tpu.memory_space<vmem>>, vector<16x128xf32>
    tpu.vector_store %arg7[%c0_6, %c0_7], %7 {strides = array<i32>} : memref<16x128xf32, #tpu.memory_space<vmem>>, vector<16x128xf32>,
    %c0_i32_8 = arith.constant 0 : i32
    %9 = arith.cmpi eq, %arg2, %c0_i32_8 : i32
    %10 = arith.extui %9 : i1 to i32
    %c0_i32_9 = arith.constant 0 : i32
    %11 = arith.cmpi ne, %10, %c0_i32_9 : i32
    scf.if %11 {
      %c0_10 = arith.constant 0 : index
      %c0_11 = arith.constant 0 : index
      %12 = vector.load %arg7[%c0_10, %c0_11] : memref<16x128xf32, #tpu.memory_space<vmem>>, vector<16x128xf32>
      %c0_12 = arith.constant 0 : index
      %c0_13 = arith.constant 0 : index
      %13 = vector.load %arg5[%c0_12, %c0_13] : memref<1x128xf32, #tpu.memory_space<vmem>>, vector<1x128xf32>
      %14 = vector.broadcast %13 : vector<1x128xf32> to vector<16x128xf32>
      %15 = arith.addf %12, %14 : vector<16x128xf32>
      %c0_14 = arith.constant 0 : index
      %c0_15 = arith.constant 0 : index
      %16 = vector.load %arg6[%c0_14, %c0_15] : memref<16x128xf32, #tpu.memory_space<vmem>>, vector<16x128xf32>
      tpu.vector_store %arg6[%c0_14, %c0_15], %15 {strides = array<i32>} : memref<16x128xf32, #tpu.memory_space<vmem>>, vector<16x128xf32>,
    } else {
    }
    return
  }
  func.func @transform_0(%arg0: i32, %arg1: i32, %arg2: i32) -> (i32, i32) {
    %c0_i32 = arith.constant 0 : i32
    return %arg0, %arg2 : i32, i32
  }
  func.func @transform_1(%arg0: i32, %arg1: i32, %arg2: i32) -> (i32, i32) {
    %c0_i32 = arith.constant 0 : i32
    return %arg2, %arg1 : i32, i32
  }
  func.func @transform_2(%arg0: i32, %arg1: i32, %arg2: i32) -> (i32, i32) {
    %c0_i32 = arith.constant 0 : i32
    %c0_i32_0 = arith.constant 0 : i32
    return %c0_i32, %arg1 : i32, i32
  }
  func.func @transform_3(%arg0: i32, %arg1: i32, %arg2: i32) -> (i32, i32) {
    %c0_i32 = arith.constant 0 : i32
    return %arg0, %arg1 : i32, i32
  }
}

</mosaic_0001>

<llo_original>
// kernel: tpu_custom_call.1
$region0: #{tpu_custom_call.1}
  #allocation0 [shape = 'u32[]', space=smem, size = 0x4, offset = 0x4, fixed_abs, tag = 'smem constant byte address 0x4 - core index']
  #allocation1 [shape = 'u32[144,128]{1,0:T(1,128)}', space=vmem, size = 0x12000, scoped, tag = 'internal scratch']
  #allocation2 [shape = 'f32[16,128]{1,0:T(8,128)}', space=vmem, size = 0x2000, scoped, tag = 'scratch operand']
  %s0 = inlined_call_operand.hbm [shape: f32[16,256], index: 0, kind: input, shape index: {}]
  %s1 = inlined_call_operand.hbm [shape: f32[256,128], index: 1, kind: input, shape index: {}]
  %s2 = inlined_call_operand.vmem [shape: f32[1,128], index: 2, kind: input, shape index: {}]
  %s3 = inlined_call_operand.hbm [shape: f32[16,128], index: 3, kind: output, shape index: {}]
  %s4 = sld [smem:[#allocation0]]
  $region38: #{tpu_custom_call.1} parent=0
    _
  %s6 = ssub.s32 1, %s4
  %s7 = scalar_select 0, %s6, %s4
  $region1: #{tpu_custom_call.1} parent=0
    #allocation3 [shape = 'u8[16384]{0}', space=vmem, size = 0x4000, scoped, tag = 'input window, operand 0, single buffered']
    #allocation4 [shape = 's32[1]{0}', space=sflag, size = 0x4, scoped, tag = 'scoped memory for tpu_custom_call.1']
    #allocation5 [shape = 's32[1]{0}', space=sflag, size = 0x4, scoped, tag = 'scoped memory for tpu_custom_call.1']
    #allocation6 [shape = 'u8[131072]{0}', space=vmem, size = 0x20000, scoped, tag = 'input window, operand 1, single buffered']
    #allocation7 [shape = 's32[1]{0}', space=sflag, size = 0x4, scoped, tag = 'scoped memory for tpu_custom_call.1']
    #allocation8 [shape = 'u8[8192]{0}', space=vmem, size = 0x2000, scoped, tag = 'output window, operand 0, single buffered']
    %8 = vsyncpa [#allocation4], 0
    %9 = vsyncpa [#allocation7], 0
    %10 = vsyncpa [#allocation5], 0
    // Predicated region
    $region2: #{tpu_custom_call.1} parent=1 // pred_check
      _
    $region3: #{tpu_custom_call.1} parent=1 // pred_check_branch
      %12 = sbr.rel (0) target = $region5
    $region4: #{tpu_custom_call.1} parent=1 // pred_region
      %s14 = ssub.s32 512, 512
      %15 = vsyncadd [#allocation4], %s14
      %s16 = sshll.u32 [#allocation3], 4
      %s17 = int_to_ptr.vmem [resolvable:$true] %s16
      %22 = dma.hbm_to_vmem [thread:$0]  %s0, 512, %s17, [#allocation4], 256, 256, 16
    $region5: #{tpu_custom_call.1} parent=1 // pred_fallthru
      _
    // Predicated region
    $region6: #{tpu_custom_call.1} parent=1 // pred_check
      _
    $region7: #{tpu_custom_call.1} parent=1 // pred_check_branch
      %24 = sbr.rel (0) target = $region9
    $region8: #{tpu_custom_call.1} parent=1 // pred_region
      %s26 = ssub.s32 4096, 4096
      %27 = vsyncadd [#allocation7], %s26
      %s28 = sshll.u32 [#allocation6], 4
      %s29 = int_to_ptr.vmem [resolvable:$true] %s28
      %34 = dma.hbm_to_vmem [thread:$0]  %s1, 4096, %s29, [#allocation7], 128, 128, 8
    $region9: #{tpu_custom_call.1} parent=1 // pred_fallthru
      _
    // Predicated region
    $region10: #{tpu_custom_call.1} parent=1 // pred_check
      _
    $region11: #{tpu_custom_call.1} parent=1 // pred_check_branch
      %36 = sbr.rel (0) target = $region13
    $region12: #{tpu_custom_call.1} parent=1 // pred_region
      _
    $region13: #{tpu_custom_call.1} parent=1 // pred_fallthru
      _
    // Predicated region
    $region14: #{tpu_custom_call.1} parent=1 // pred_check
      _
    $region15: #{tpu_custom_call.1} parent=1 // pred_check_branch
      %38 = sbr.rel (0) target = $region17
    $region16: #{tpu_custom_call.1} parent=1 // pred_region
      %39 = dma.done [#allocation4], 512
    $region17: #{tpu_custom_call.1} parent=1 // pred_fallthru
      _
    // Predicated region
    $region18: #{tpu_custom_call.1} parent=1 // pred_check
      _
    $region19: #{tpu_custom_call.1} parent=1 // pred_check_branch
      %41 = sbr.rel (0) target = $region21
    $region20: #{tpu_custom_call.1} parent=1 // pred_region
      %42 = dma.done [#allocation7], 4096
    $region21: #{tpu_custom_call.1} parent=1 // pred_fallthru
      _
    %p43 = scmp.eq.s32.totalorder 0, 0
    // Predicated region
    $region22: #{tpu_custom_call.1} parent=1 // pred_check
      %p44 = pneg %p43
    $region23: #{tpu_custom_call.1} parent=1 // pred_check_branch
      %46 = sbr.rel (%p44) target = $region25
    $region24: #{tpu_custom_call.1} parent=1 // pred_region
      %47 = vst [vmem:[#allocation2] sm:$0xff] 0.0
      %48 = vst [vmem:[#allocation2 + $0x8] sm:$0xff] 0.0
    $region25: #{tpu_custom_call.1} parent=1 // pred_fallthru
      _
    %v49 = vld [vmem:[#allocation2] sm:$0xff]
    %v50 = vld [vmem:[#allocation2 + $0x8] sm:$0xff]
    %v51 = vld [vmem:[#allocation3] sm:$0xff]
    %v52 = vld [vmem:[#allocation3 + $0x8] sm:$0xff]
    %v53 = vld [vmem:[#allocation3 + $0x10] sm:$0xff]
    %v54 = vld [vmem:[#allocation3 + $0x18] sm:$0xff]
    %v55 = vld [vmem:[#allocation6] sm:$0xff]
    %v56 = vld [vmem:[#allocation6 + $0x8] sm:$0xff]
    %v57 = vld [vmem:[#allocation6 + $0x10] sm:$0xff]
    %v58 = vld [vmem:[#allocation6 + $0x18] sm:$0xff]
    %v59 = vld [vmem:[#allocation6 + $0x20] sm:$0xff]
    %v60 = vld [vmem:[#allocation6 + $0x28] sm:$0xff]
    %v61 = vld [vmem:[#allocation6 + $0x30] sm:$0xff]
    %v62 = vld [vmem:[#allocation6 + $0x38] sm:$0xff]
    %v63 = vld [vmem:[#allocation6 + $0x40] sm:$0xff]
    %v64 = vld [vmem:[#allocation6 + $0x48] sm:$0xff]
    %v65 = vld [vmem:[#allocation6 + $0x50] sm:$0xff]
    %v66 = vld [vmem:[#allocation6 + $0x58] sm:$0xff]
    %v67 = vld [vmem:[#allocation6 + $0x60] sm:$0xff]
    %v68 = vld [vmem:[#allocation6 + $0x68] sm:$0xff]
    %v69 = vld [vmem:[#allocation6 + $0x70] sm:$0xff]
    %v70 = vld [vmem:[#allocation6 + $0x78] sm:$0xff]
    %v71 = vld [vmem:[#allocation6 + $0x80] sm:$0xff]
    %v72 = vld [vmem:[#allocation6 + $0x88] sm:$0xff]
    %v73 = vld [vmem:[#allocation6 + $0x90] sm:$0xff]
    %v74 = vld [vmem:[#allocation6 + $0x98] sm:$0xff]
    %v75 = vld [vmem:[#allocation6 + $0xa0] sm:$0xff]
    %v76 = vld [vmem:[#allocation6 + $0xa8] sm:$0xff]
    %v77 = vld [vmem:[#allocation6 + $0xb0] sm:$0xff]
    %v78 = vld [vmem:[#allocation6 + $0xb8] sm:$0xff]
    %v79 = vld [vmem:[#allocation6 + $0xc0] sm:$0xff]
    %v80 = vld [vmem:[#allocation6 + $0xc8] sm:$0xff]
    %v81 = vld [vmem:[#allocation6 + $0xd0] sm:$0xff]
    %v82 = vld [vmem:[#allocation6 + $0xd8] sm:$0xff]
    %v83 = vld [vmem:[#allocation6 + $0xe0] sm:$0xff]
    %v84 = vld [vmem:[#allocation6 + $0xe8] sm:$0xff]
    %v85 = vld [vmem:[#allocation6 + $0xf0] sm:$0xff]
    %v86 = vld [vmem:[#allocation6 + $0xf8] sm:$0xff]
    %87 = vmatprep.subr.mxu0 0.0
    %88 = vmatpush1.msra.mxu0 %v70
    %89 = vmatprep.subr.mxu0 0.0
    %90 = vmatpush1.msra.mxu0 %v69
    %91 = vmatprep.subr.mxu0 0.0
    %92 = vmatpush1.msra.mxu0 %v68
    %93 = vmatprep.subr.mxu0 0.0
    %94 = vmatpush1.msra.mxu0 %v67
    %95 = vmatprep.subr.mxu0 0.0
    %96 = vmatpush1.msra.mxu0 %v66
    %97 = vmatprep.subr.mxu0 0.0
    %98 = vmatpush1.msra.mxu0 %v65
    %99 = vmatprep.subr.mxu0 0.0
    %100 = vmatpush1.msra.mxu0 %v64
    %101 = vmatprep.subr.mxu0 0.0
    %102 = vmatpush1.msra.mxu0 %v63
    %103 = vmatprep.subr.mxu0 0.0
    %104 = vmatpush1.msra.mxu0 %v62
    %105 = vmatprep.subr.mxu0 0.0
    %106 = vmatpush1.msra.mxu0 %v61
    %107 = vmatprep.subr.mxu0 0.0
    %108 = vmatpush1.msra.mxu0 %v60
    %109 = vmatprep.subr.mxu0 0.0
    %110 = vmatpush1.msra.mxu0 %v59
    %111 = vmatprep.subr.mxu0 0.0
    %112 = vmatpush1.msra.mxu0 %v58
    %113 = vmatprep.subr.mxu0 0.0
    %114 = vmatpush1.msra.mxu0 %v57
    %115 = vmatprep.subr.mxu0 0.0
    %116 = vmatpush1.msra.mxu0 %v56
    %117 = vmatprep.subr.mxu0 0.0
    %118 = vmatpush1.msra.mxu0 %v55
    %119 = vmatprep.subr.mxu0 0.0
    %120 = vmatpush2.msra.mxu0 %v86
    %121 = vmatprep.subr.mxu0 0.0
    %122 = vmatpush2.msra.mxu0 %v85
    %123 = vmatprep.subr.mxu0 0.0
    %124 = vmatpush2.msra.mxu0 %v84
    %125 = vmatprep.subr.mxu0 0.0
    %126 = vmatpush2.msra.mxu0 %v83
    %127 = vmatprep.subr.mxu0 0.0
    %128 = vmatpush2.msra.mxu0 %v82
    %129 = vmatprep.subr.mxu0 0.0
    %130 = vmatpush2.msra.mxu0 %v81
    %131 = vmatprep.subr.mxu0 0.0
    %132 = vmatpush2.msra.mxu0 %v80
    %133 = vmatprep.subr.mxu0 0.0
    %134 = vmatpush2.msra.mxu0 %v79
    %135 = vmatprep.subr.mxu0 0.0
    %136 = vmatpush2.msra.mxu0 %v78
    %137 = vmatprep.subr.mxu0 0.0
    %138 = vmatpush2.msra.mxu0 %v77
    %139 = vmatprep.subr.mxu0 0.0
    %140 = vmatpush2.msra.mxu0 %v76
    %141 = vmatprep.subr.mxu0 0.0
    %142 = vmatpush2.msra.mxu0 %v75
    %143 = vmatprep.subr.mxu0 0.0
    %144 = vmatpush2.msra.mxu0 %v74
    %145 = vmatprep.subr.mxu0 0.0
    %146 = vmatpush2.msra.mxu0 %v73
    %147 = vmatprep.subr.mxu0 0.0
    %148 = vmatpush2.msra.mxu0 %v72
    %149 = vmatprep.subr.mxu0 0.0
    %150 = vmatpush2.msra.mxu0 %v71
    %151 = vmatprep.mubr.f32.mxu0 %v52
    %152 = vmatmul.mubr.f32.gmra.mxu0 %v51
    %v153 = vpop.f32.mrf.mxu0
    %v154 = vadd.f32 0.0, %v153
    %v155 = vpop.f32.mrf.mxu0
    %156 = vmatprep.mubr.f32.mxu0 %v54
    %157 = vmatmul.mubr.f32.gmra.mxu0 %v53
    %v158 = vpop.f32.mrf.mxu0
    %v159 = vadd.f32 0.0, %v158
    %v160 = vpop.f32.mrf.mxu0
    %161 = vdwg.mxu0
    %v162 = vadd.f32 %v49, %v154
    %v163 = vadd.f32 %v50, %v159
    %164 = vst [vmem:[#allocation2] sm:$0xff] %v162
    %165 = vst [vmem:[#allocation2 + $0x8] sm:$0xff] %v163
    // Predicated region
    $region26: #{tpu_custom_call.1} parent=1 // pred_check
      %p166 = pneg %p43
    $region27: #{tpu_custom_call.1} parent=1 // pred_check_branch
      %168 = sbr.rel (%p166) target = $region29
    $region28: #{tpu_custom_call.1} parent=1 // pred_region
      %v169 = vld [vmem:[#allocation2] sm:$0xff]
      %v170 = vld [vmem:[#allocation2 + $0x8] sm:$0xff]
      %v171 = vld [vmem:[%s2] sm:$0x1]
      %v173 = vlaneseq
      %v174 = vshrl.u32 %v173, 7
      %v175 = vsub.s32 0, %v174
      %v176 = vrot.slane %v171, %v175
      %v178 = vadd.f32 %v169, %v176
      %v179 = vadd.f32 %v170, %v176
      %180 = vst [vmem:[#allocation8] sm:$0xff] %v178
      %181 = vst [vmem:[#allocation8 + $0x8] sm:$0xff] %v179
    $region29: #{tpu_custom_call.1} parent=1 // pred_fallthru
      _
    // Predicated region
    $region30: #{tpu_custom_call.1} parent=1 // pred_check
      _
    $region31: #{tpu_custom_call.1} parent=1 // pred_check_branch
      %183 = sbr.rel (0) target = $region33
    $region32: #{tpu_custom_call.1} parent=1 // pred_region
      %s185 = ssub.s32 256, 256
      %186 = vsyncadd [#allocation5], %s185
      %s187 = sshll.u32 [#allocation8], 4
      %s188 = int_to_ptr.vmem [resolvable:$true] %s187
      %193 = dma.vmem_to_hbm [thread:$0]  %s188, 256, %s3, [#allocation5], 128, 128, 8
    $region33: #{tpu_custom_call.1} parent=1 // pred_fallthru
      _
    // Predicated region
    $region34: #{tpu_custom_call.1} parent=1 // pred_check
      _
    $region35: #{tpu_custom_call.1} parent=1 // pred_check_branch
      %195 = sbr.rel (0) target = $region37
    $region36: #{tpu_custom_call.1} parent=1 // pred_region
      %196 = dma.done [#allocation5], 256
    $region37: #{tpu_custom_call.1} parent=1 // pred_fallthru
      _
    %197 = vsyncpa [#allocation4], 1
    %198 = vsyncpa [#allocation7], 1
    %199 = vsyncpa [#allocation5], 1

</llo_original>
